<compile_context>
chip_gen: v5e
topology: v5e:2x2
jax: 0.10.0
libtpu: 0.0.40
codegen_flags: <defaults>
</compile_context>

<pallas_src>
import math

import jax
import jax.numpy as jnp
import numpy as np
from jax.experimental import pallas as pl
from jax.experimental.pallas import tpu as pltpu


# ---------------------------------------------------------------------------
# Pallas kernel: broadcast add of the positional encoding over the batch rows
# ---------------------------------------------------------------------------
def _add_pe_kernel(x_ref, pe_ref, o_ref):
    # x_ref: (B, ...) block, pe_ref: (1, ...) block -> broadcast over batch.
    o_ref[...] = (x_ref[...] + pe_ref[...]).astype(o_ref.dtype)


# ---------------------------------------------------------------------------
# Tiling helpers (physical VMEM accounting, double-buffered)
# ---------------------------------------------------------------------------
_VMEM_BUDGET = 12 << 20  # bytes; < 16 MiB v5e scoped default, << 32 MiB v6e/v7x


def _round_up(x, m):
    return (x + m - 1) // m * m


def _sublane(dtype):
    # sublane tile: 8 for f32, 16 for bf16, 32 for int8
    return max(8, 32 // jnp.dtype(dtype).itemsize)


def _choose_row_tile(num_rows, batch, x_isz, out_isz, pe_isz):
    """Row tile for the dense (B, R, 128) layout.  Rows are already sublane-
    dense, so the footprint per 128-lane row is exact (no padding waste)."""
    per_row = (batch * (x_isz + out_isz) + pe_isz) * 128 * 2   # 2x = double buffer
    tr = max(8, (_VMEM_BUDGET // per_row) // 8 * 8)
    if tr >= num_rows:
        if num_rows >= 16:
            # Whole problem fits one block: still split into >=2 "parallel"
            # steps so both v7x TensorCores get work (one extra ~0.35us step).
            tr = min(_round_up(pl.cdiv(num_rows, 2), 8), num_rows)
        else:
            tr = num_rows          # single full block (full-dim, no 8-mult rule)
    return tr


def _choose_col_tile(cols, batch, x_dt, out_dt, pe_dt):
    """Column tile for the fallback 2-D (B, cols) layout (cols % 128 != 0).
    Accounts for sublane padding of the small batch dim and per-dtype sizes."""
    per_col = (_round_up(batch, _sublane(x_dt)) * jnp.dtype(x_dt).itemsize
               + _round_up(batch, _sublane(out_dt)) * jnp.dtype(out_dt).itemsize
               + _round_up(1, _sublane(pe_dt)) * jnp.dtype(pe_dt).itemsize) * 2
    if cols <= 128 or cols * per_col <= _VMEM_BUDGET:
        return cols                                # single full block
    tile = max(128, (_VMEM_BUDGET // per_col) // 128 * 128)
    return min(tile, cols // 128 * 128)            # cdiv grid masks the remainder


# ---------------------------------------------------------------------------
# Wrapper: PyTorch-compatible forward
# ---------------------------------------------------------------------------
def crop_and_flatten_pe(pe, h, w, dtype=None):
    """Crop pe[:, :, :h, :w] and flatten to (1, C*h*w).  Callers should cache
    this per (h, w) (it is the only strided-slice copy in the forward path)."""
    _, c, _, _ = pe.shape
    pe_flat = pe[:, :, :h, :w].reshape(1, c * h * w)
    if dtype is not None:
        pe_flat = pe_flat.astype(dtype)
    return pe_flat


def positional_encoding_2d(x, pe, *, pe_flat=None, use_pallas=None, donate_x=False):
    """x: (B, C, H, W); pe: (1, C, h_max, w_max). Returns x + pe[..., :H, :W].

    pe_flat: optional cached result of crop_and_flatten_pe(pe, H, W, x.dtype).
    use_pallas: None = auto (Pallas only when x is large enough to amortize
    the launch), True/False to force.
    """
    b, c, h, w = x.shape
    cols = c * h * w
    # Intentional: keep the output in x.dtype (cast PE once) instead of
    # promoting bf16 -> f32; halves write traffic for low-precision inputs.
    out_dtype = x.dtype

    if pe_flat is None:
        pe_flat = crop_and_flatten_pe(pe, h, w, dtype=out_dtype)
    else:
        pe_flat = pe_flat.astype(out_dtype)

    if use_pallas is None:
        # Tiny activations: pallas_call launch overhead dominates a
        # sub-microsecond mem-bound add; let XLA fuse it.
        use_pallas = x.size * jnp.dtype(x.dtype).itemsize >= (1 << 20)
    if not use_pallas:
        return (x + pe_flat.reshape(1, c, h, w)).astype(out_dtype)

    x_isz = jnp.dtype(x.dtype).itemsize
    o_isz = jnp.dtype(out_dtype).itemsize
    p_isz = jnp.dtype(pe_flat.dtype).itemsize
    io_alias = {0: 0} if (donate_x and out_dtype == x.dtype) else {}

    if cols % 128 == 0:
        # Dense 3-D layout: last two block dims (rows, 128) are fully packed
        # on (sublane, lane) regardless of the batch size.
        num_rows = cols // 128
        x3 = x.reshape(b, num_rows, 128)
        pe3 = pe_flat.reshape(1, num_rows, 128)
        tr = _choose_row_tile(num_rows, b, x_isz, o_isz, p_isz)
        grid = (pl.cdiv(num_rows, tr),)
        out3 = pl.pallas_call(
            _add_pe_kernel,
            out_shape=jax.ShapeDtypeStruct((b, num_rows, 128), out_dtype),
            grid_spec=pltpu.PrefetchScalarGridSpec(
                num_scalar_prefetch=0,
                grid=grid,
                in_specs=[
                    pl.BlockSpec((b, tr, 128), lambda j: (0, j, 0)),  # x rows
                    pl.BlockSpec((1, tr, 128), lambda j: (0, j, 0)),  # pe slab
                ],
                out_specs=pl.BlockSpec((b, tr, 128), lambda j: (0, j, 0)),
            ),
            compiler_params=pltpu.CompilerParams(
                dimension_semantics=("parallel",)),
            input_output_aliases=io_alias,
        )(x3, pe3)
        return out3.reshape(b, c, h, w)

    # Edge case: cols not a multiple of 128 -> flat 2-D layout with a
    # multiple-of-128 column tile (or one full block when small).
    x2 = x.reshape(b, cols)
    tile = _choose_col_tile(cols, b, x.dtype, out_dtype, pe_flat.dtype)
    grid = (pl.cdiv(cols, tile),)
    out2 = pl.pallas_call(
        _add_pe_kernel,
        out_shape=jax.ShapeDtypeStruct((b, cols), out_dtype),
        grid_spec=pltpu.PrefetchScalarGridSpec(
            num_scalar_prefetch=0,
            grid=grid,
            in_specs=[
                pl.BlockSpec((b, tile), lambda j: (0, j)),
                pl.BlockSpec((1, tile), lambda j: (0, j)),
            ],
            out_specs=pl.BlockSpec((b, tile), lambda j: (0, j)),
        ),
        compiler_params=pltpu.CompilerParams(
            dimension_semantics=("parallel",)),
        input_output_aliases=io_alias,
    )(x2, pe_flat)
    return out2.reshape(b, c, h, w)


def get_pe_by_size(pe, h, w):
    """Equivalent of PositionalEncoding2D.get_pe_by_size."""
    return pe[:, :, :h, :w]


# ---------------------------------------------------------------------------
# PE buffer construction (module __init__), in JAX
# ---------------------------------------------------------------------------
def build_pe(dim, h_max, w_max):
    assert dim % 4 == 0, "dim must be a multiple of 4 (as the PyTorch init assumes)"
    half = dim // 2
    nq = half // 2
    inv = jnp.exp(-jnp.arange(0.0, half, 2.0, dtype=jnp.float32) / dim
                  * jnp.log(jnp.float32(10000.0)))                    # (nq,)
    h_pos = jnp.arange(0.0, h_max, dtype=jnp.float32)
    w_pos = jnp.arange(0.0, w_max, dtype=jnp.float32)
    h_arg = inv[:, None] * h_pos[None, :]                             # (nq, h_max)
    w_arg = inv[:, None] * w_pos[None, :]                             # (nq, w_max)

    pe = jnp.zeros((dim, h_max, w_max), jnp.float32)
    pe = pe.at[0:half:2, :, :].set(
        jnp.broadcast_to(jnp.sin(h_arg)[:, :, None], (nq, h_max, w_max)))
    pe = pe.at[1:half:2, :, :].set(
        jnp.broadcast_to(jnp.cos(h_arg)[:, :, None], (nq, h_max, w_max)))
    pe = pe.at[half::2, :, :].set(
        jnp.broadcast_to(jnp.sin(w_arg)[:, None, :], (nq, h_max, w_max)))
    pe = pe.at[half + 1::2, :, :].set(
        jnp.broadcast_to(jnp.cos(w_arg)[:, None, :], (nq, h_max, w_max)))
    return pe[None]                                                   # (1, dim, h_max, w_max)


# ---------------------------------------------------------------------------
# NumPy reference mirroring the PyTorch code exactly (for verification)
# ---------------------------------------------------------------------------
def build_pe_np(dim, h_max, w_max):
    pe = np.zeros((1, dim, h_max, w_max), np.float64)
    div = np.exp(-np.arange(0.0, dim // 2, 2) / dim * math.log(10000.0))[:, None]
    w_pos = np.arange(0.0, w_max)
    h_pos = np.arange(0.0, h_max)
    pe[:, :dim // 2:2, :, :] = np.tile(
        np.sin(h_pos * div)[None, :, :, None], (1, 1, 1, w_max))
    pe[:, 1:dim // 2:2, :, :] = np.tile(
        np.cos(h_pos * div)[None, :, :, None], (1, 1, 1, w_max))
    pe[:, dim // 2::2, :, :] = np.tile(
        np.sin(w_pos * div)[None, :, None, :], (1, 1, h_max, 1))
    pe[:, dim // 2 + 1::2, :, :] = np.tile(
        np.cos(w_pos * div)[None, :, None, :], (1, 1, h_max, 1))
    return pe.astype(np.float32)


if __name__ == "__main__":
    # Shapes consistent with the module: dim=32 channels, 16x16 max spatial
    # grid, forward on a 12x13 feature map with batch 2.
    B, C, H_MAX, W_MAX = 2, 32, 16, 16
    H, W = 12, 13

    key = jax.random.PRNGKey(0)
    x = jax.random.normal(key, (B, C, H, W), jnp.float32)
    pe = build_pe(C, H_MAX, W_MAX)                       # module __init__ buffer

    # Forward through the Pallas kernel (dense 3-D path; cols = 4992 = 39*128).
    out = positional_encoding_2d(x, pe, use_pallas=True)
    out = jax.block_until_ready(out)

    # --- verification against a NumPy re-implementation of the PyTorch code ---
    pe_np = build_pe_np(C, H_MAX, W_MAX)
    np.testing.assert_allclose(np.asarray(pe), pe_np, rtol=1e-6, atol=1e-6)
    ref = np.asarray(x) + pe_np[:, :, :H, :W]
    np.testing.assert_allclose(np.asarray(out), ref, rtol=1e-6, atol=1e-6)

    # Auto-gated path (tiny input -> fused XLA add): identical numerics.
    out_fb = jax.block_until_ready(positional_encoding_2d(x, pe))
    np.testing.assert_allclose(np.asarray(out_fb), ref, rtol=1e-6, atol=1e-6)

    # Edge-case 2-D path: cols (=700) not a multiple of 128.
    C2, H2, W2 = 20, 5, 7
    x_b = jax.random.normal(jax.random.PRNGKey(1), (B, C2, H2, W2), jnp.float32)
    pe_b = build_pe(C2, 8, 8)
    out_b = jax.block_until_ready(positional_encoding_2d(x_b, pe_b, use_pallas=True))
    ref_b = np.asarray(x_b) + build_pe_np(C2, 8, 8)[:, :, :H2, :W2]
    np.testing.assert_allclose(np.asarray(out_b), ref_b, rtol=1e-6, atol=1e-6)

    print("KERNEL_OK")
</pallas_src>

<mosaic_0001>
module attributes {stable_mosaic.version = 11 : i64} {
  func.func @_add_pe_kernel(%arg0: i32, %arg1: memref<2x24x128xf32, #tpu.memory_space<vmem>>, %arg2: memref<1x24x128xf32, #tpu.memory_space<vmem>>, %arg3: memref<2x24x128xf32, #tpu.memory_space<vmem>>) attributes {dimension_semantics = [#tpu.dimension_semantics<parallel>], iteration_bounds = array<i64: 2>, scalar_prefetch = 0 : i64, scratch_operands = 0 : i64, tpu.core_type = #tpu.core_type<tc>, window_params = [{transform_indices = @transform_0, window_bounds = array<i64: 2, 24, 128>}, {transform_indices = @transform_1, window_bounds = array<i64: 1, 24, 128>}, {transform_indices = @transform_2, window_bounds = array<i64: 2, 24, 128>}]} {
    %c0 = arith.constant 0 : index
    %c0_0 = arith.constant 0 : index
    %c0_1 = arith.constant 0 : index
    %0 = vector.load %arg1[%c0, %c0_0, %c0_1] : memref<2x24x128xf32, #tpu.memory_space<vmem>>, vector<2x24x128xf32>
    %c0_2 = arith.constant 0 : index
    %c0_3 = arith.constant 0 : index
    %c0_4 = arith.constant 0 : index
    %1 = vector.load %arg2[%c0_2, %c0_3, %c0_4] : memref<1x24x128xf32, #tpu.memory_space<vmem>>, vector<1x24x128xf32>
    %2 = vector.broadcast %1 : vector<1x24x128xf32> to vector<2x24x128xf32>
    %3 = arith.addf %0, %2 : vector<2x24x128xf32>
    %c0_5 = arith.constant 0 : index
    %c0_6 = arith.constant 0 : index
    %c0_7 = arith.constant 0 : index
    %4 = vector.load %arg3[%c0_5, %c0_6, %c0_7] : memref<2x24x128xf32, #tpu.memory_space<vmem>>, vector<2x24x128xf32>
    tpu.vector_store %arg3[%c0_5, %c0_6, %c0_7], %3 {strides = array<i32>} : memref<2x24x128xf32, #tpu.memory_space<vmem>>, vector<2x24x128xf32>,
    return
  }
  func.func @transform_0(%arg0: i32) -> (i32, i32, i32) {
    %c0_i32 = arith.constant 0 : i32
    %c0_i32_0 = arith.constant 0 : i32
    %c0_i32_1 = arith.constant 0 : i32
    return %c0_i32, %arg0, %c0_i32_0 : i32, i32, i32
  }
  func.func @transform_1(%arg0: i32) -> (i32, i32, i32) {
    %c0_i32 = arith.constant 0 : i32
    %c0_i32_0 = arith.constant 0 : i32
    %c0_i32_1 = arith.constant 0 : i32
    return %c0_i32, %arg0, %c0_i32_0 : i32, i32, i32
  }
  func.func @transform_2(%arg0: i32) -> (i32, i32, i32) {
    %c0_i32 = arith.constant 0 : i32
    %c0_i32_0 = arith.constant 0 : i32
    %c0_i32_1 = arith.constant 0 : i32
    return %c0_i32, %arg0, %c0_i32_0 : i32, i32, i32
  }
}

</mosaic_0001>

<llo_original>
// kernel: tpu_custom_call.1
$region0: #{tpu_custom_call.1}
  #allocation0 [shape = 'u32[]', space=smem, size = 0x4, offset = 0x4, fixed_abs, tag = 'smem constant byte address 0x4 - core index']
  #allocation1 [shape = 'u32[72,128]{1,0:T(1,128)}', space=vmem, size = 0x9000, scoped, tag = 'internal scratch']
  %s0 = inlined_call_operand.vmem [shape: f32[2,39,128], index: 0, kind: input, shape index: {}]
  %s1 = inlined_call_operand.vmem [shape: f32[1,39,128], index: 1, kind: input, shape index: {}]
  %s2 = inlined_call_operand.vmem [shape: f32[2,39,128], index: 2, kind: output, shape index: {}]
  %s3 = sld [smem:[#allocation0]]
  $region141: #{tpu_custom_call.1} parent=0
    _
  %s5 = ssub.s32 1, %s3
  %s6 = scalar_select 0, %s5, %s3
  $region1: #{tpu_custom_call.1} parent=0
    #allocation2 [shape = 'u8[49152]{0}', space=vmem, size = 0xc000, scoped, tag = 'input window, operand 0']
    #allocation3 [shape = 'u8[49152]{0}', space=vmem, size = 0xc000, scoped, tag = 'output window, operand 0']
    loop: start=0, step=1, limit=4
    $region2: #{tpu_custom_call.1} parent=1 // loop_pre_header
      _
    $region3: #{tpu_custom_call.1} parent=1 // loop_header
      %s8 = sphi 0, %s12
      %p9 = scmp.ge.s32.totalorder %s8, 4
      %s18 = sphi 0, %s20
      %s21 = sphi 0, %s18
      %s22 = sphi 0, %s21
      %s38 = sphi 0, %s22
      %s44 = sphi 0, %s46
      %s47 = sphi 0, %s44
      %s48 = sphi 0, %s47
      %s64 = sphi 0, %s48
      %s70 = sphi 0, %s72
      %s73 = sphi 0, %s70
      %s74 = sphi 0, %s73
      %s90 = sphi 0, %s74
    $region4: #{tpu_custom_call.1} parent=1 // loop_header_branch
      %11 = sbr.rel (%p9) target = $region8
    $region5: #{tpu_custom_call.1} parent=1 // loop_body
      %s13 = ssub.s32 %s8, 1
      %s14 = ssub.s32 %s8, 2
      %s15 = sadd.s32 %s8, 1
      %s16 = ssub.s32 %s8, %s15
      %p17 = scmp.eq.s32.totalorder %s16, 0
      %s19 = sadd.s32 %s18, 1
      %s20 = scalar_select %p17, %s18, %s19
      %p23 = pneg %p17
      %p24 = scmp.eq.s32.totalorder %s8, 1
      %p25 = por %p23, %p24
      %p26 = scmp.ne.s32.totalorder %s18, %s21
      %p27 = scmp.eq.s32.totalorder %s8, 0
      %p28 = por %p26, %p27
      %p29 = scmp.ne.s32.totalorder %s18, %s21
      %p30 = scmp.eq.s32.totalorder %s13, 1
      %p31 = por %p29, %p30
      %p32 = scmp.ne.s32.totalorder %s21, %s22
      %p33 = scmp.eq.s32.totalorder %s13, 0
      %p34 = por %p32, %p33
      %p35 = scmp.ne.s32.totalorder %s21, %s22
      %p36 = scmp.eq.s32.totalorder %s14, 1
      %p37 = por %p35, %p36
      %p39 = scmp.ne.s32.totalorder %s22, %s38
      %p40 = scmp.eq.s32.totalorder %s14, 0
      %p41 = por %p39, %p40
      %s42 = ssub.s32 %s8, %s15
      %p43 = scmp.eq.s32.totalorder %s42, 0
      %s45 = sadd.s32 %s44, 1
      %s46 = scalar_select %p43, %s44, %s45
      %p49 = pneg %p43
      %p50 = scmp.eq.s32.totalorder %s8, 1
      %p51 = por %p49, %p50
      %p52 = scmp.ne.s32.totalorder %s44, %s47
      %p53 = scmp.eq.s32.totalorder %s8, 0
      %p54 = por %p52, %p53
      %p55 = scmp.ne.s32.totalorder %s44, %s47
      %p56 = scmp.eq.s32.totalorder %s13, 1
      %p57 = por %p55, %p56
      %p58 = scmp.ne.s32.totalorder %s47, %s48
      %p59 = scmp.eq.s32.totalorder %s13, 0
      %p60 = por %p58, %p59
      %p61 = scmp.ne.s32.totalorder %s47, %s48
      %p62 = scmp.eq.s32.totalorder %s14, 1
      %p63 = por %p61, %p62
      %p65 = scmp.ne.s32.totalorder %s48, %s64
      %p66 = scmp.eq.s32.totalorder %s14, 0
      %p67 = por %p65, %p66
      %s68 = ssub.s32 %s8, %s15
      %p69 = scmp.eq.s32.totalorder %s68, 0
      %s71 = sadd.s32 %s70, 1
      %s72 = scalar_select %p69, %s70, %s71
      %p75 = pneg %p69
      %p76 = scmp.eq.s32.totalorder %s8, 1
      %p77 = por %p75, %p76
      %p78 = scmp.ne.s32.totalorder %s70, %s73
      %p79 = scmp.eq.s32.totalorder %s8, 0
      %p80 = por %p78, %p79
      %p81 = scmp.ne.s32.totalorder %s70, %s73
      %p82 = scmp.eq.s32.totalorder %s13, 1
      %p83 = por %p81, %p82
      %p84 = scmp.ne.s32.totalorder %s73, %s74
      %p85 = scmp.eq.s32.totalorder %s13, 0
      %p86 = por %p84, %p85
      %p87 = scmp.ne.s32.totalorder %s73, %s74
      %p88 = scmp.eq.s32.totalorder %s14, 1
      %p89 = por %p87, %p88
      %p91 = scmp.ne.s32.totalorder %s74, %s90
      %p92 = scmp.eq.s32.totalorder %s14, 0
      %p93 = por %p91, %p92
      %p94 = scmp.le.s32.totalorder 1, %s8
      %p95 = scmp.lt.s32.totalorder %s8, 3
      %p96 = pnand %p94, %p95
      %p97 = pneg %p96
      // Predicated region
      $region9: #{tpu_custom_call.1} parent=5 // pred_check
        _
      $region10: #{tpu_custom_call.1} parent=5 // pred_check_branch
        %99 = sbr.rel (%p96) target = $region12
      $region11: #{tpu_custom_call.1} parent=5 // pred_region
        %s100 = ssub.s32 %s8, 1
      $region12: #{tpu_custom_call.1} parent=5 // pred_fallthru
        _
      %p101 = scmp.lt.s32.totalorder %s8, 2
      // Predicated region
      $region13: #{tpu_custom_call.1} parent=5 // pred_check
        %p102 = pneg %p101
      $region14: #{tpu_custom_call.1} parent=5 // pred_check_branch
        %104 = sbr.rel (%p102) target = $region16
      $region15: #{tpu_custom_call.1} parent=5 // pred_region
        // Predicated region
        $region17: #{tpu_custom_call.1} parent=15 // pred_check
          %p105 = pneg %p28
        $region18: #{tpu_custom_call.1} parent=15 // pred_check_branch
          %107 = sbr.rel (%p105) target = $region20
        $region19: #{tpu_custom_call.1} parent=15 // pred_region
          %s108 = sand.u32 %s18, 1
          %s109 = sand.u32 %s18, 1
          %s110 = smul.addr %s109, 48
          %s111 = scalar_lea.vmem [#allocation2], %s110
          %s112 = smul.u32 3, %s8
          %s113 = ssub.s32 5, %s112
          %p114 = scmp.lt.s32.totalorder %s113, 3
          %s115 = scalar_select %p114, %s113, 3
          %s116 = smul.u32 16, %s115
          %p117 = scmp.ne.s32.totalorder 0, %s116
          %s118 = smul.addr %s112, 8
          %s119 = scalar_lea.vmem %s0, %s118
          // Predicated region
          $region21: #{tpu_custom_call.1} parent=19 // pred_check
            %p120 = pneg %p117
          $region22: #{tpu_custom_call.1} parent=19 // pred_check_branch
            %122 = sbr.rel (%p120) target = $region24
          $region23: #{tpu_custom_call.1} parent=19 // pred_region
            // Predicated region
            $region25: #{tpu_custom_call.1} parent=23 // pred_check
              _
            $region26: #{tpu_custom_call.1} parent=23 // pred_check_branch
              %124 = sbr.rel (0) target = $region28
            $region27: #{tpu_custom_call.1} parent=23 // pred_region
              // Predicated region
              $region47: #{tpu_custom_call.1} parent=27 // pred_check
                _
              $region48: #{tpu_custom_call.1} parent=27 // pred_check_branch
                %187 = sbr.rel (0) target = $region50
              $region49: #{tpu_custom_call.1} parent=27 // pred_region
                %s188 = sdiv.u32.pop %s115, 3
                %s189 = srem.u32.pop %s115, 3
                // While loop
                $region51: #{tpu_custom_call.1} parent=49 // loop_pre_header
                  _
                $region52: #{tpu_custom_call.1} parent=49 // loop_header
                  %s191 = sphi 0, %s193
                  %p192 = scmp.ge.s32.totalorder %s191, %s188
                  %s196 = sphi 0, %s213
                  %s197 = sphi %s119, %s216
                  %s198 = sphi %s111, %s217
                $region53: #{tpu_custom_call.1} parent=49 // loop_header_branch
                  %195 = sbr.rel (%p192) target = $region57
                $region54: #{tpu_custom_call.1} parent=49 // loop_body
                  %v199 = vld [vmem:[%s197] sm:$0xff]
                  %200 = vst [vmem:[%s198] sm:$0xff] %v199
                  %v201 = vld [vmem:[%s197 + $0x8] sm:$0xff]
                  %202 = vst [vmem:[%s198 + $0x8] sm:$0xff] %v201
                  %v203 = vld [vmem:[%s197 + $0x10] sm:$0xff]
                  %204 = vst [vmem:[%s198 + $0x10] sm:$0xff] %v203
                  %v205 = vld [vmem:[%s197 + $0x28] sm:$0xff]
                  %206 = vst [vmem:[%s198 + $0x18] sm:$0xff] %v205
                  %v207 = vld [vmem:[%s197 + $0x30] sm:$0xff]
                  %208 = vst [vmem:[%s198 + $0x20] sm:$0xff] %v207
                  %v209 = vld [vmem:[%s197 + $0x38] sm:$0xff]
                  %210 = vst [vmem:[%s198 + $0x28] sm:$0xff] %v209
                  %s211 = sadd.s32 1, %s196
                  %p212 = scmp.ge.s32.totalorder %s211, %s188
                  %s213 = scalar_select %p212, 0, %s211
                  %s214 = smul.u32 %s213, 24
                  %s215 = smul.u32 %s213, 24
                  %s216 = scalar_lea.vmem %s119, %s214
                  %s217 = scalar_lea.vmem %s111, %s215 [#allocation2]
                $region55: #{tpu_custom_call.1} parent=49 // loop_footer
                  %s193 = sadd.s32 %s191, 1
                $region56: #{tpu_custom_call.1} parent=49 // loop_footer_branch
                  %190 = sbr.rel target = $region52
                $region57: #{tpu_custom_call.1} parent=49 // loop_exit
                  _
                %s218 = sdiv.u32.pop %s115, 3
                %s219 = srem.u32.pop %s115, 3
                %s220 = smul.u32 %s218, 3
                %s221 = smul.u32 8, %s220
                %s222 = scalar_lea.vmem %s119, %s221
                %s223 = smul.u32 8, %s220
                %s224 = scalar_lea.vmem %s111, %s223 [#allocation2]
                // While loop
                $region58: #{tpu_custom_call.1} parent=49 // loop_pre_header
                  _
                $region59: #{tpu_custom_call.1} parent=49 // loop_header
                  %s226 = sphi 0, %s228
                  %p227 = scmp.ge.s32.totalorder %s226, %s219
                  %s231 = sphi 0, %s240
                  %s232 = sphi %s222, %s243
                  %s233 = sphi %s224, %s244
                $region60: #{tpu_custom_call.1} parent=49 // loop_header_branch
                  %230 = sbr.rel (%p227) target = $region64
                $region61: #{tpu_custom_call.1} parent=49 // loop_body
                  %v234 = vld [vmem:[%s232] sm:$0xff]
                  %235 = vst [vmem:[%s233] sm:$0xff] %v234
                  %v236 = vld [vmem:[%s232 + $0x28] sm:$0xff]
                  %237 = vst [vmem:[%s233 + $0x18] sm:$0xff] %v236
                  %s238 = sadd.s32 1, %s231
                  %p239 = scmp.ge.s32.totalorder %s238, %s219
                  %s240 = scalar_select %p239, 0, %s238
                  %s241 = smul.u32 %s240, 8
                  %s242 = smul.u32 %s240, 8
                  %s243 = scalar_lea.vmem %s222, %s241
                  %s244 = scalar_lea.vmem %s224, %s242 [#allocation2]
                $region62: #{tpu_custom_call.1} parent=49 // loop_footer
                  %s228 = sadd.s32 %s226, 1
                $region63: #{tpu_custom_call.1} parent=49 // loop_footer_branch
                  %225 = sbr.rel target = $region59
                $region64: #{tpu_custom_call.1} parent=49 // loop_exit
                  _
              $region50: #{tpu_custom_call.1} parent=27 // pred_fallthru
                _
              // Predicated region
              $region65: #{tpu_custom_call.1} parent=27 // pred_check
                _
              $region66: #{tpu_custom_call.1} parent=27 // pred_check_branch
                %246 = sbr.rel target = $region68
              $region67: #{tpu_custom_call.1} parent=27 // pred_region
                _
              $region68: #{tpu_custom_call.1} parent=27 // pred_fallthru
                _
            $region28: #{tpu_custom_call.1} parent=23 // pred_fallthru
              _
            // Predicated region
            $region29: #{tpu_custom_call.1} parent=23 // pred_check
              _
            $region30: #{tpu_custom_call.1} parent=23 // pred_check_branch
              %126 = sbr.rel target = $region32
            $region31: #{tpu_custom_call.1} parent=23 // pred_region
              %s128 = ssub.s32 256, 1
              %s129 = sdiv.u32.pop %s115, 3
              %s130 = srem.u32.pop %s115, 3
              // While loop
              $region33: #{tpu_custom_call.1} parent=31 // loop_pre_header
                _
              $region34: #{tpu_custom_call.1} parent=31 // loop_header
                %s132 = sphi 0, %s134
                %p133 = scmp.ge.s32.totalorder %s132, %s129
                %s137 = sphi 0, %s154
                %s138 = sphi %s119, %s157
                %s139 = sphi %s111, %s158
              $region35: #{tpu_custom_call.1} parent=31 // loop_header_branch
                %136 = sbr.rel (%p133) target = $region39
              $region36: #{tpu_custom_call.1} parent=31 // loop_body
                %v140 = vld [vmem:[%s138] sm:%s128]
                %141 = vst [vmem:[%s139] sm:%s128] %v140
                %v142 = vld [vmem:[%s138 + $0x8] sm:%s128]
                %143 = vst [vmem:[%s139 + $0x8] sm:%s128] %v142
                %v144 = vld [vmem:[%s138 + $0x10] sm:%s128]
                %145 = vst [vmem:[%s139 + $0x10] sm:%s128] %v144
                %v146 = vld [vmem:[%s138 + $0x28] sm:%s128]
                %147 = vst [vmem:[%s139 + $0x18] sm:%s128] %v146
                %v148 = vld [vmem:[%s138 + $0x30] sm:%s128]
                %149 = vst [vmem:[%s139 + $0x20] sm:%s128] %v148
                %v150 = vld [vmem:[%s138 + $0x38] sm:%s128]
                %151 = vst [vmem:[%s139 + $0x28] sm:%s128] %v150
                %s152 = sadd.s32 1, %s137
                %p153 = scmp.ge.s32.totalorder %s152, %s129
                %s154 = scalar_select %p153, 0, %s152
                %s155 = smul.u32 %s154, 24
                %s156 = smul.u32 %s154, 24
                %s157 = scalar_lea.vmem %s119, %s155
                %s158 = scalar_lea.vmem %s111, %s156 [#allocation2]
              $region37: #{tpu_custom_call.1} parent=31 // loop_footer
                %s134 = sadd.s32 %s132, 1
              $region38: #{tpu_custom_call.1} parent=31 // loop_footer_branch
                %131 = sbr.rel target = $region34
              $region39: #{tpu_custom_call.1} parent=31 // loop_exit
                _
              %s159 = sdiv.u32.pop %s115, 3
              %s160 = srem.u32.pop %s115, 3
              %s161 = smul.u32 %s159, 3
              %s162 = smul.u32 8, %s161
              %s163 = scalar_lea.vmem %s119, %s162
              %s164 = smul.u32 8, %s161
              %s165 = scalar_lea.vmem %s111, %s164 [#allocation2]
              // While loop
              $region40: #{tpu_custom_call.1} parent=31 // loop_pre_header
                _
              $region41: #{tpu_custom_call.1} parent=31 // loop_header
                %s167 = sphi 0, %s169
                %p168 = scmp.ge.s32.totalorder %s167, %s160
                %s172 = sphi 0, %s181
                %s173 = sphi %s163, %s184
                %s174 = sphi %s165, %s185
              $region42: #{tpu_custom_call.1} parent=31 // loop_header_branch
                %171 = sbr.rel (%p168) target = $region46
              $region43: #{tpu_custom_call.1} parent=31 // loop_body
                %v175 = vld [vmem:[%s173] sm:%s128]
                %176 = vst [vmem:[%s174] sm:%s128] %v175
                %v177 = vld [vmem:[%s173 + $0x28] sm:%s128]
                %178 = vst [vmem:[%s174 + $0x18] sm:%s128] %v177
                %s179 = sadd.s32 1, %s172
                %p180 = scmp.ge.s32.totalorder %s179, %s160
                %s181 = scalar_select %p180, 0, %s179
                %s182 = smul.u32 %s181, 8
                %s183 = smul.u32 %s181, 8
                %s184 = scalar_lea.vmem %s163, %s182
                %s185 = scalar_lea.vmem %s165, %s183 [#allocation2]
              $region44: #{tpu_custom_call.1} parent=31 // loop_footer
                %s169 = sadd.s32 %s167, 1
              $region45: #{tpu_custom_call.1} parent=31 // loop_footer_branch
                %166 = sbr.rel target = $region41
              $region46: #{tpu_custom_call.1} parent=31 // loop_exit
                _
            $region32: #{tpu_custom_call.1} parent=23 // pred_fallthru
              _
          $region24: #{tpu_custom_call.1} parent=19 // pred_fallthru
            _
          %247 = vnop
        $region20: #{tpu_custom_call.1} parent=15 // pred_fallthru
          _
        // Predicated region
        $region69: #{tpu_custom_call.1} parent=15 // pred_check
          %p248 = pneg %p54
        $region70: #{tpu_custom_call.1} parent=15 // pred_check_branch
          %250 = sbr.rel (%p248) target = $region72
        $region71: #{tpu_custom_call.1} parent=15 // pred_region
          %s251 = smul.u32 3, %s8
          %s252 = ssub.s32 5, %s251
          %p253 = scmp.lt.s32.totalorder %s252, 3
          %s254 = scalar_select %p253, %s252, 3
          %s255 = smul.u32 8, %s254
          %p256 = scmp.lt.s32.totalorder %s251, 4
          %s257 = scalar_select %p256, %s251, 4
          %s258 = smul.addr %s257, 8
          %s259 = scalar_lea.vmem %s1, %s258
          %s260 = smul.u32 3, %s8
          %s261 = ssub.s32 5, %s260
          %p262 = scmp.lt.s32.totalorder %s261, 3
          %s263 = scalar_select %p262, %s261, 3
          %s264 = smul.u32 8, %s263
        $region72: #{tpu_custom_call.1} parent=15 // pred_fallthru
          _
      $region16: #{tpu_custom_call.1} parent=5 // pred_fallthru
        _
      %p265 = scmp.le.s32.totalorder 1, %s8
      %p266 = scmp.lt.s32.totalorder %s8, 3
      %p267 = pnand %p265, %p266
      %p268 = pneg %p267
      // Predicated region
      $region73: #{tpu_custom_call.1} parent=5 // pred_check
        _
      $region74: #{tpu_custom_call.1} parent=5 // pred_check_branch
        %270 = sbr.rel (%p267) target = $region76
      $region75: #{tpu_custom_call.1} parent=5 // pred_region
        %s271 = ssub.s32 %s8, 1
        %s272 = sand.u32 %s21, 1
        %s273 = sand.u32 %s21, 1
        %s274 = smul.addr %s273, 48
        %s275 = scalar_lea.vmem [#allocation2], %s274
        // Predicated region
        $region77: #{tpu_custom_call.1} parent=75 // pred_check
          %p276 = pneg %p34
        $region78: #{tpu_custom_call.1} parent=75 // pred_check_branch
          %278 = sbr.rel (%p276) target = $region80
        $region79: #{tpu_custom_call.1} parent=75 // pred_region
          _
        $region80: #{tpu_custom_call.1} parent=75 // pred_fallthru
          _
        %s279 = sand.u32 %s21, 1
        %s280 = sand.u32 %s21, 1
        %s281 = smul.addr %s280, 48
        %s282 = scalar_lea.vmem [#allocation2], %s281
        %p283 = pneg %p34
        %p284 = pneg %p31
        %s285 = smul.u32 3, %s13
        %s286 = ssub.s32 5, %s285
        %p287 = scmp.lt.s32.totalorder %s286, 3
        %s288 = scalar_select %p287, %s286, 3
        %s289 = smul.u32 8, %s288
        %p290 = scmp.lt.s32.totalorder %s285, 4
        %s291 = scalar_select %p290, %s285, 4
        %s292 = smul.addr %s291, 8
        %s293 = scalar_lea.vmem %s1, %s292
        %p294 = pneg %p60
        %p295 = pneg %p57
        %p296 = pneg %p86
        %p297 = pneg %p83
        %s298 = sand.u32 %s73, 1
        %s299 = sand.u32 %s73, 1
        %s300 = smul.addr %s299, 48
        %s301 = scalar_lea.vmem [#allocation3], %s300
        %s302 = smul.u32 3, %s13
        %s303 = ssub.s32 5, %s302
        %p304 = scmp.lt.s32.totalorder %s303, 3
        %s305 = scalar_select %p304, %s303, 3
        %s306 = smul.u32 16, %s305
        %s307 = smul.u32 3, %s13
        %s308 = ssub.s32 5, %s307
        %p309 = scmp.lt.s32.totalorder %s308, 3
        %s310 = scalar_select %p309, %s308, 3
        %s311 = smul.u32 8, %s310
        %p312 = scmp.lt.s32.totalorder %s307, 4
        %s313 = scalar_select %p312, %s307, 4
        %s314 = smul.addr %s313, 8
        %s315 = scalar_lea.vmem %s1, %s314
        %s316 = smul.u32 3, %s13
        %s317 = ssub.s32 5, %s316
        %p318 = scmp.lt.s32.totalorder %s317, 3
        %s319 = scalar_select %p318, %s317, 3
        %s320 = smul.u32 8, %s319
        %s321 = smul.u32 3, %s13
        %s322 = ssub.s32 5, %s321
        %p323 = scmp.lt.s32.totalorder %s322, 3
        %s324 = scalar_select %p323, %s322, 3
        %s325 = smul.u32 16, %s324
        %v326 = vld [vmem:[%s275] sm:$0xff]
        %v327 = vld [vmem:[%s275 + $0x8] sm:$0xff]
        %v328 = vld [vmem:[%s275 + $0x10] sm:$0xff]
        %v329 = vld [vmem:[%s275 + $0x18] sm:$0xff]
        %v330 = vld [vmem:[%s275 + $0x20] sm:$0xff]
        %v331 = vld [vmem:[%s275 + $0x28] sm:$0xff]
        %v332 = vld [vmem:[%s315] sm:$0xff]
        %v333 = vld [vmem:[%s315 + $0x8] sm:$0xff]
        %v334 = vld [vmem:[%s315 + $0x10] sm:$0xff]
        %v335 = vadd.f32 %v326, %v332
        %v336 = vadd.f32 %v327, %v333
        %v337 = vadd.f32 %v328, %v334
        %v338 = vadd.f32 %v329, %v332
        %v339 = vadd.f32 %v330, %v333
        %v340 = vadd.f32 %v331, %v334
        %341 = vst [vmem:[%s301] sm:$0xff] %v335
        %342 = vst [vmem:[%s301 + $0x8] sm:$0xff] %v336
        %343 = vst [vmem:[%s301 + $0x10] sm:$0xff] %v337
        %344 = vst [vmem:[%s301 + $0x18] sm:$0xff] %v338
        %345 = vst [vmem:[%s301 + $0x20] sm:$0xff] %v339
        %346 = vst [vmem:[%s301 + $0x28] sm:$0xff] %v340
        %s347 = sand.u32 %s73, 1
        %s348 = sand.u32 %s73, 1
        %s349 = smul.addr %s348, 48
        %s350 = scalar_lea.vmem [#allocation3], %s349
        // Predicated region
        $region81: #{tpu_custom_call.1} parent=75 // pred_check
          %p351 = pneg %p83
        $region82: #{tpu_custom_call.1} parent=75 // pred_check_branch
          %353 = sbr.rel (%p351) target = $region84
        $region83: #{tpu_custom_call.1} parent=75 // pred_region
          %s354 = smul.u32 3, %s13
          %s355 = ssub.s32 5, %s354
          %p356 = scmp.lt.s32.totalorder %s355, 3
          %s357 = scalar_select %p356, %s355, 3
          %s358 = smul.u32 16, %s357
          %p359 = scmp.ne.s32.totalorder 0, %s358
          %s360 = smul.addr %s354, 8
          %s361 = scalar_lea.vmem %s2, %s360
          // Predicated region
          $region85: #{tpu_custom_call.1} parent=83 // pred_check
            %p362 = pneg %p359
          $region86: #{tpu_custom_call.1} parent=83 // pred_check_branch
            %364 = sbr.rel (%p362) target = $region88
          $region87: #{tpu_custom_call.1} parent=83 // pred_region
            // Predicated region
            $region89: #{tpu_custom_call.1} parent=87 // pred_check
              _
            $region90: #{tpu_custom_call.1} parent=87 // pred_check_branch
              %366 = sbr.rel (0) target = $region92
            $region91: #{tpu_custom_call.1} parent=87 // pred_region
              // Predicated region
              $region111: #{tpu_custom_call.1} parent=91 // pred_check
                _
              $region112: #{tpu_custom_call.1} parent=91 // pred_check_branch
                %429 = sbr.rel (0) target = $region114
              $region113: #{tpu_custom_call.1} parent=91 // pred_region
                %s430 = sdiv.u32.pop %s357, 3
                %s431 = srem.u32.pop %s357, 3
                // While loop
                $region115: #{tpu_custom_call.1} parent=113 // loop_pre_header
                  _
                $region116: #{tpu_custom_call.1} parent=113 // loop_header
                  %s433 = sphi 0, %s435
                  %p434 = scmp.ge.s32.totalorder %s433, %s430
                  %s438 = sphi 0, %s455
                  %s439 = sphi %s350, %s458
                  %s440 = sphi %s361, %s459
                $region117: #{tpu_custom_call.1} parent=113 // loop_header_branch
                  %437 = sbr.rel (%p434) target = $region121
                $region118: #{tpu_custom_call.1} parent=113 // loop_body
                  %v441 = vld [vmem:[%s439] sm:$0xff]
                  %442 = vst [vmem:[%s440] sm:$0xff] %v441
                  %v443 = vld [vmem:[%s439 + $0x8] sm:$0xff]
                  %444 = vst [vmem:[%s440 + $0x8] sm:$0xff] %v443
                  %v445 = vld [vmem:[%s439 + $0x10] sm:$0xff]
                  %446 = vst [vmem:[%s440 + $0x10] sm:$0xff] %v445
                  %v447 = vld [vmem:[%s439 + $0x18] sm:$0xff]
                  %448 = vst [vmem:[%s440 + $0x28] sm:$0xff] %v447
                  %v449 = vld [vmem:[%s439 + $0x20] sm:$0xff]
                  %450 = vst [vmem:[%s440 + $0x30] sm:$0xff] %v449
                  %v451 = vld [vmem:[%s439 + $0x28] sm:$0xff]
                  %452 = vst [vmem:[%s440 + $0x38] sm:$0xff] %v451
                  %s453 = sadd.s32 1, %s438
                  %p454 = scmp.ge.s32.totalorder %s453, %s430
                  %s455 = scalar_select %p454, 0, %s453
                  %s456 = smul.u32 %s455, 24
                  %s457 = smul.u32 %s455, 24
                  %s458 = scalar_lea.vmem %s350, %s456 [#allocation3]
                  %s459 = scalar_lea.vmem %s361, %s457
                $region119: #{tpu_custom_call.1} parent=113 // loop_footer
                  %s435 = sadd.s32 %s433, 1
                $region120: #{tpu_custom_call.1} parent=113 // loop_footer_branch
                  %432 = sbr.rel target = $region116
                $region121: #{tpu_custom_call.1} parent=113 // loop_exit
                  _
                %s460 = sdiv.u32.pop %s357, 3
                %s461 = srem.u32.pop %s357, 3
                %s462 = smul.u32 %s460, 3
                %s463 = smul.u32 8, %s462
                %s464 = scalar_lea.vmem %s350, %s463 [#allocation3]
                %s465 = smul.u32 8, %s462
                %s466 = scalar_lea.vmem %s361, %s465
                // While loop
                $region122: #{tpu_custom_call.1} parent=113 // loop_pre_header
                  _
                $region123: #{tpu_custom_call.1} parent=113 // loop_header
                  %s468 = sphi 0, %s470
                  %p469 = scmp.ge.s32.totalorder %s468, %s461
                  %s473 = sphi 0, %s482
                  %s474 = sphi %s464, %s485
                  %s475 = sphi %s466, %s486
                $region124: #{tpu_custom_call.1} parent=113 // loop_header_branch
                  %472 = sbr.rel (%p469) target = $region128
                $region125: #{tpu_custom_call.1} parent=113 // loop_body
                  %v476 = vld [vmem:[%s474] sm:$0xff]
                  %477 = vst [vmem:[%s475] sm:$0xff] %v476
                  %v478 = vld [vmem:[%s474 + $0x18] sm:$0xff]
                  %479 = vst [vmem:[%s475 + $0x28] sm:$0xff] %v478
                  %s480 = sadd.s32 1, %s473
                  %p481 = scmp.ge.s32.totalorder %s480, %s461
                  %s482 = scalar_select %p481, 0, %s480
                  %s483 = smul.u32 %s482, 8
                  %s484 = smul.u32 %s482, 8
                  %s485 = scalar_lea.vmem %s464, %s483 [#allocation3]
                  %s486 = scalar_lea.vmem %s466, %s484
                $region126: #{tpu_custom_call.1} parent=113 // loop_footer
                  %s470 = sadd.s32 %s468, 1
                $region127: #{tpu_custom_call.1} parent=113 // loop_footer_branch
                  %467 = sbr.rel target = $region123
                $region128: #{tpu_custom_call.1} parent=113 // loop_exit
                  _
              $region114: #{tpu_custom_call.1} parent=91 // pred_fallthru
                _
              // Predicated region
              $region129: #{tpu_custom_call.1} parent=91 // pred_check
                _
              $region130: #{tpu_custom_call.1} parent=91 // pred_check_branch
                %488 = sbr.rel target = $region132
              $region131: #{tpu_custom_call.1} parent=91 // pred_region
                _
              $region132: #{tpu_custom_call.1} parent=91 // pred_fallthru
                _
            $region92: #{tpu_custom_call.1} parent=87 // pred_fallthru
              _
            // Predicated region
            $region93: #{tpu_custom_call.1} parent=87 // pred_check
              _
            $region94: #{tpu_custom_call.1} parent=87 // pred_check_branch
              %368 = sbr.rel target = $region96
            $region95: #{tpu_custom_call.1} parent=87 // pred_region
              %s370 = ssub.s32 256, 1
              %s371 = sdiv.u32.pop %s357, 3
              %s372 = srem.u32.pop %s357, 3
              // While loop
              $region97: #{tpu_custom_call.1} parent=95 // loop_pre_header
                _
              $region98: #{tpu_custom_call.1} parent=95 // loop_header
                %s374 = sphi 0, %s376
                %p375 = scmp.ge.s32.totalorder %s374, %s371
                %s379 = sphi 0, %s396
                %s380 = sphi %s350, %s399
                %s381 = sphi %s361, %s400
              $region99: #{tpu_custom_call.1} parent=95 // loop_header_branch
                %378 = sbr.rel (%p375) target = $region103
              $region100: #{tpu_custom_call.1} parent=95 // loop_body
                %v382 = vld [vmem:[%s380] sm:%s370]
                %383 = vst [vmem:[%s381] sm:%s370] %v382
                %v384 = vld [vmem:[%s380 + $0x8] sm:%s370]
                %385 = vst [vmem:[%s381 + $0x8] sm:%s370] %v384
                %v386 = vld [vmem:[%s380 + $0x10] sm:%s370]
                %387 = vst [vmem:[%s381 + $0x10] sm:%s370] %v386
                %v388 = vld [vmem:[%s380 + $0x18] sm:%s370]
                %389 = vst [vmem:[%s381 + $0x28] sm:%s370] %v388
                %v390 = vld [vmem:[%s380 + $0x20] sm:%s370]
                %391 = vst [vmem:[%s381 + $0x30] sm:%s370] %v390
                %v392 = vld [vmem:[%s380 + $0x28] sm:%s370]
                %393 = vst [vmem:[%s381 + $0x38] sm:%s370] %v392
                %s394 = sadd.s32 1, %s379
                %p395 = scmp.ge.s32.totalorder %s394, %s371
                %s396 = scalar_select %p395, 0, %s394
                %s397 = smul.u32 %s396, 24
                %s398 = smul.u32 %s396, 24
                %s399 = scalar_lea.vmem %s350, %s397 [#allocation3]
                %s400 = scalar_lea.vmem %s361, %s398
              $region101: #{tpu_custom_call.1} parent=95 // loop_footer
                %s376 = sadd.s32 %s374, 1
              $region102: #{tpu_custom_call.1} parent=95 // loop_footer_branch
                %373 = sbr.rel target = $region98
              $region103: #{tpu_custom_call.1} parent=95 // loop_exit
                _
              %s401 = sdiv.u32.pop %s357, 3
              %s402 = srem.u32.pop %s357, 3
              %s403 = smul.u32 %s401, 3
              %s404 = smul.u32 8, %s403
              %s405 = scalar_lea.vmem %s350, %s404 [#allocation3]
              %s406 = smul.u32 8, %s403
              %s407 = scalar_lea.vmem %s361, %s406
              // While loop
              $region104: #{tpu_custom_call.1} parent=95 // loop_pre_header
                _
              $region105: #{tpu_custom_call.1} parent=95 // loop_header
                %s409 = sphi 0, %s411
                %p410 = scmp.ge.s32.totalorder %s409, %s402
                %s414 = sphi 0, %s423
                %s415 = sphi %s405, %s426
                %s416 = sphi %s407, %s427
              $region106: #{tpu_custom_call.1} parent=95 // loop_header_branch
                %413 = sbr.rel (%p410) target = $region110
              $region107: #{tpu_custom_call.1} parent=95 // loop_body
                %v417 = vld [vmem:[%s415] sm:%s370]
                %418 = vst [vmem:[%s416] sm:%s370] %v417
                %v419 = vld [vmem:[%s415 + $0x18] sm:%s370]
                %420 = vst [vmem:[%s416 + $0x28] sm:%s370] %v419
                %s421 = sadd.s32 1, %s414
                %p422 = scmp.ge.s32.totalorder %s421, %s402
                %s423 = scalar_select %p422, 0, %s421
                %s424 = smul.u32 %s423, 8
                %s425 = smul.u32 %s423, 8
                %s426 = scalar_lea.vmem %s405, %s424 [#allocation3]
                %s427 = scalar_lea.vmem %s407, %s425
              $region108: #{tpu_custom_call.1} parent=95 // loop_footer
                %s411 = sadd.s32 %s409, 1
              $region109: #{tpu_custom_call.1} parent=95 // loop_footer_branch
                %408 = sbr.rel target = $region105
              $region110: #{tpu_custom_call.1} parent=95 // loop_exit
                _
            $region96: #{tpu_custom_call.1} parent=87 // pred_fallthru
              _
          $region88: #{tpu_custom_call.1} parent=83 // pred_fallthru
            _
          %489 = vnop
        $region84: #{tpu_custom_call.1} parent=75 // pred_fallthru
          _
      $region76: #{tpu_custom_call.1} parent=5 // pred_fallthru
        _
      %p490 = scmp.le.s32.totalorder 2, %s8
      // Predicated region
      $region133: #{tpu_custom_call.1} parent=5 // pred_check
        %p491 = pneg %p490
      $region134: #{tpu_custom_call.1} parent=5 // pred_check_branch
        %493 = sbr.rel (%p491) target = $region136
      $region135: #{tpu_custom_call.1} parent=5 // pred_region
        %s494 = ssub.s32 %s8, 2
        // Predicated region
        $region137: #{tpu_custom_call.1} parent=135 // pred_check
          %p495 = pneg %p89
        $region138: #{tpu_custom_call.1} parent=135 // pred_check_branch
          %497 = sbr.rel (%p495) target = $region140
        $region139: #{tpu_custom_call.1} parent=135 // pred_region
          %s498 = sand.u32 %s74, 1
          %s499 = sand.u32 %s74, 1
          %s500 = smul.addr %s499, 48
          %s501 = scalar_lea.vmem [#allocation3], %s500
        $region140: #{tpu_custom_call.1} parent=135 // pred_fallthru
          _
      $region136: #{tpu_custom_call.1} parent=5 // pred_fallthru
        _
    $region6: #{tpu_custom_call.1} parent=1 // loop_footer
      %s12 = sadd.s32 1, %s8
    $region7: #{tpu_custom_call.1} parent=1 // loop_footer_branch
      %7 = sbr.rel target = $region3
    $region8: #{tpu_custom_call.1} parent=1 // loop_exit
      _

</llo_original>
